<compile_context>
chip_gen: v6e
topology: v6e:2x2x1
jax: 0.10.0
libtpu: 0.0.40
codegen_flags: <defaults>
</compile_context>

<pallas_src>
import math

import jax
import jax.numpy as jnp
from jax.experimental import pallas as pl
from jax.experimental.pallas import tpu as pltpu

# ---- packed-parameter slab layout (8 sublanes x 128 lanes, f32) -------------
# rows 0:6, cols  0:8   -> W1 (out=6, in=8)   [PyTorch (out, in) layout]
# rows 0:4, cols  8:14  -> W2 (out=4, in=6)
# rows 0:1, cols 14:18  -> W3 (out=1, in=4)
# rows 0:6, col  18     -> b1 (stored as a column)
# rows 0:4, col  19     -> b2
# rows 0:1, col  20     -> b3
_W1_COL, _W2_COL, _W3_COL = 0, 8, 14
_B1_COL, _B2_COL, _B3_COL = 18, 19, 20
_SLAB_SHAPE = (8, 128)

# (in_dim, out_dim, weight column offset, bias column) per layer.
_LAYERS = ((8, 6, _W1_COL, _B1_COL),
           (6, 4, _W2_COL, _B2_COL),
           (4, 1, _W3_COL, _B3_COL))


def _sigmoid(x):
    # exp goes to the EUP slot; the rest is elementwise on the VPU.
    return 1.0 / (1.0 + jnp.exp(-x))


def mlp_kernel(xT_ref, p_ref, oT_ref):
    """xT_ref: (8, TB) input, features on sublanes / batch on lanes.
    p_ref:  (8, 128) packed parameter slab (single DMA).
    oT_ref: (1, TB) lane-dense output."""
    tb = xT_ref.shape[1]

    def dense_T(a, in_dim, out_dim, w_col, b_col):
        # h[n, b] = bias[n] + sum_k W[n, k] * a[k, b]
        # Each term: (out_dim,1) lane-broadcast x (1,TB) sublane-broadcast FMA
        # on the VPU; loop is fully unrolled (K <= 8), all slices static.
        h = jnp.broadcast_to(p_ref[0:out_dim, b_col:b_col + 1], (out_dim, tb))
        for k in range(in_dim):
            w_k = p_ref[0:out_dim, w_col + k:w_col + k + 1]   # (out_dim, 1)
            h = h + w_k * a[k:k + 1, :]                       # -> (out_dim, TB)
        return _sigmoid(h)

    a = xT_ref[...]                                           # (8, TB)
    for in_dim, out_dim, w_col, b_col in _LAYERS:
        a = dense_T(a, in_dim, out_dim, w_col, b_col)
    oT_ref[...] = a.astype(oT_ref.dtype)                      # (1, TB)


def pack_params(w1, b1, w2, b2, w3, b3):
    """Pack PyTorch-layout (out, in) weights and (out,) biases into one slab."""
    slab = jnp.zeros(_SLAB_SHAPE, jnp.float32)
    slab = slab.at[0:6, _W1_COL:_W1_COL + 8].set(w1)
    slab = slab.at[0:4, _W2_COL:_W2_COL + 6].set(w2)
    slab = slab.at[0:1, _W3_COL:_W3_COL + 4].set(w3)
    slab = slab.at[0:6, _B1_COL:_B1_COL + 1].set(b1[:, None])
    slab = slab.at[0:4, _B2_COL:_B2_COL + 1].set(b2[:, None])
    slab = slab.at[0:1, _B3_COL:_B3_COL + 1].set(b3[:, None])
    return slab


def mlp_forward(x, params_slab, *, batch_tile=512):
    """x: (B, 8) f32, params_slab from pack_params(). Returns (B, 1) f32."""
    B = x.shape[0]
    xT = x.T  # (8, B): layout plumbing so batch rides the lane axis.

    if B >= batch_tile and B % batch_tile == 0:
        # Large batch: pipelined batch grid, parallel (megacore) semantics.
        tb = batch_tile
        grid = (B // tb,)
        in_specs = [pl.BlockSpec((8, tb), lambda i: (0, i)),
                    pl.BlockSpec(_SLAB_SHAPE, lambda i: (0, 0))]  # resident
        out_specs = pl.BlockSpec((1, tb), lambda i: (0, i))
        compiler_params = pltpu.CompilerParams(
            dimension_semantics=("parallel",))
    else:
        # Small batch: whole problem is one VMEM block, no grid.
        grid = ()
        in_specs = [pl.BlockSpec((8, B), lambda: (0, 0)),
                    pl.BlockSpec(_SLAB_SHAPE, lambda: (0, 0))]
        out_specs = pl.BlockSpec((1, B), lambda: (0, 0))
        compiler_params = None

    yT = pl.pallas_call(
        mlp_kernel,
        out_shape=jax.ShapeDtypeStruct((1, B), jnp.float32),
        grid=grid,
        in_specs=in_specs,
        out_specs=out_specs,
        compiler_params=compiler_params,
    )(xT, params_slab)
    return yT.T  # (B, 1)


def init_linear(key, in_features, out_features):
    # torch.nn.Linear init: U(-1/sqrt(in), 1/sqrt(in)); PyTorch (out, in) layout.
    kw, kb = jax.random.split(key)
    bound = 1.0 / math.sqrt(in_features)
    w = jax.random.uniform(kw, (out_features, in_features), jnp.float32, -bound, bound)
    b = jax.random.uniform(kb, (out_features,), jnp.float32, -bound, bound)
    return w, b


if __name__ == "__main__":
    key = jax.random.PRNGKey(0)
    kx, k1, k2, k3 = jax.random.split(key, 4)

    B = 8
    x = jax.random.normal(kx, (B, 8), jnp.float32)

    w1, b1 = init_linear(k1, 8, 6)
    w2, b2 = init_linear(k2, 6, 4)
    w3, b3 = init_linear(k3, 4, 1)

    slab = pack_params(w1, b1, w2, b2, w3, b3)
    y = mlp_forward(x, slab)
    jax.block_until_ready(y)

    # Reference in plain JAX, same math as the PyTorch module (x @ W.T + b).
    h1 = _sigmoid(x @ w1.T + b1)
    h2 = _sigmoid(h1 @ w2.T + b2)
    y_ref = _sigmoid(h2 @ w3.T + b3)
    assert y.shape == (B, 1)
    assert jnp.allclose(y, y_ref.reshape(B, 1), atol=1e-5), "mismatch vs reference"

    print("KERNEL_OK")
</pallas_src>

<mosaic_0001>
module attributes {stable_mosaic.version = 11 : i64} {
  func.func @mlp_kernel(%arg0: memref<8x8xf32, #tpu.memory_space<vmem>>, %arg1: memref<8x128xf32, #tpu.memory_space<vmem>>, %arg2: memref<1x8xf32, #tpu.memory_space<vmem>>) attributes {dimension_semantics = [], scalar_prefetch = 0 : i64, scratch_operands = 0 : i64, tpu.core_type = #tpu.core_type<tc>} {
    %c0 = arith.constant 0 : index
    %c0_0 = arith.constant 0 : index
    %0 = vector.load %arg0[%c0, %c0_0] : memref<8x8xf32, #tpu.memory_space<vmem>>, vector<8x8xf32>
    %c0_1 = arith.constant 0 : index
    %c18 = arith.constant 18 : index
    %1 = vector.load %arg1[%c0_1, %c18] : memref<8x128xf32, #tpu.memory_space<vmem>>, vector<6x1xf32>
    %2 = vector.shape_cast %1 : vector<6x1xf32> to vector<6x1xf32>
    %3 = vector.broadcast %2 : vector<6x1xf32> to vector<6x8xf32>
    %c0_2 = arith.constant 0 : index
    %c0_3 = arith.constant 0 : index
    %4 = vector.load %arg1[%c0_2, %c0_3] : memref<8x128xf32, #tpu.memory_space<vmem>>, vector<6x1xf32>
    %5 = vector.extract_strided_slice %0 {offsets = [0, 0], sizes = [1, 8], strides = [1, 1]} : vector<8x8xf32> to vector<1x8xf32>
    %6 = vector.broadcast %4 : vector<6x1xf32> to vector<6x8xf32>
    %7 = vector.broadcast %5 : vector<1x8xf32> to vector<6x8xf32>
    %8 = arith.mulf %6, %7 : vector<6x8xf32>
    %9 = arith.addf %3, %8 : vector<6x8xf32>
    %c0_4 = arith.constant 0 : index
    %c1 = arith.constant 1 : index
    %10 = vector.load %arg1[%c0_4, %c1] : memref<8x128xf32, #tpu.memory_space<vmem>>, vector<6x1xf32>
    %11 = vector.extract_strided_slice %0 {offsets = [1, 0], sizes = [1, 8], strides = [1, 1]} : vector<8x8xf32> to vector<1x8xf32>
    %12 = vector.broadcast %10 : vector<6x1xf32> to vector<6x8xf32>
    %13 = vector.broadcast %11 : vector<1x8xf32> to vector<6x8xf32>
    %14 = arith.mulf %12, %13 : vector<6x8xf32>
    %15 = arith.addf %9, %14 : vector<6x8xf32>
    %c0_5 = arith.constant 0 : index
    %c2 = arith.constant 2 : index
    %16 = vector.load %arg1[%c0_5, %c2] : memref<8x128xf32, #tpu.memory_space<vmem>>, vector<6x1xf32>
    %17 = vector.extract_strided_slice %0 {offsets = [2, 0], sizes = [1, 8], strides = [1, 1]} : vector<8x8xf32> to vector<1x8xf32>
    %18 = vector.broadcast %16 : vector<6x1xf32> to vector<6x8xf32>
    %19 = vector.broadcast %17 : vector<1x8xf32> to vector<6x8xf32>
    %20 = arith.mulf %18, %19 : vector<6x8xf32>
    %21 = arith.addf %15, %20 : vector<6x8xf32>
    %c0_6 = arith.constant 0 : index
    %c3 = arith.constant 3 : index
    %22 = vector.load %arg1[%c0_6, %c3] : memref<8x128xf32, #tpu.memory_space<vmem>>, vector<6x1xf32>
    %23 = vector.extract_strided_slice %0 {offsets = [3, 0], sizes = [1, 8], strides = [1, 1]} : vector<8x8xf32> to vector<1x8xf32>
    %24 = vector.broadcast %22 : vector<6x1xf32> to vector<6x8xf32>
    %25 = vector.broadcast %23 : vector<1x8xf32> to vector<6x8xf32>
    %26 = arith.mulf %24, %25 : vector<6x8xf32>
    %27 = arith.addf %21, %26 : vector<6x8xf32>
    %c0_7 = arith.constant 0 : index
    %c4 = arith.constant 4 : index
    %28 = vector.load %arg1[%c0_7, %c4] : memref<8x128xf32, #tpu.memory_space<vmem>>, vector<6x1xf32>
    %29 = vector.extract_strided_slice %0 {offsets = [4, 0], sizes = [1, 8], strides = [1, 1]} : vector<8x8xf32> to vector<1x8xf32>
    %30 = vector.broadcast %28 : vector<6x1xf32> to vector<6x8xf32>
    %31 = vector.broadcast %29 : vector<1x8xf32> to vector<6x8xf32>
    %32 = arith.mulf %30, %31 : vector<6x8xf32>
    %33 = arith.addf %27, %32 : vector<6x8xf32>
    %c0_8 = arith.constant 0 : index
    %c5 = arith.constant 5 : index
    %34 = vector.load %arg1[%c0_8, %c5] : memref<8x128xf32, #tpu.memory_space<vmem>>, vector<6x1xf32>
    %35 = vector.extract_strided_slice %0 {offsets = [5, 0], sizes = [1, 8], strides = [1, 1]} : vector<8x8xf32> to vector<1x8xf32>
    %36 = vector.broadcast %34 : vector<6x1xf32> to vector<6x8xf32>
    %37 = vector.broadcast %35 : vector<1x8xf32> to vector<6x8xf32>
    %38 = arith.mulf %36, %37 : vector<6x8xf32>
    %39 = arith.addf %33, %38 : vector<6x8xf32>
    %c0_9 = arith.constant 0 : index
    %c6 = arith.constant 6 : index
    %40 = vector.load %arg1[%c0_9, %c6] : memref<8x128xf32, #tpu.memory_space<vmem>>, vector<6x1xf32>
    %41 = vector.extract_strided_slice %0 {offsets = [6, 0], sizes = [1, 8], strides = [1, 1]} : vector<8x8xf32> to vector<1x8xf32>
    %42 = vector.broadcast %40 : vector<6x1xf32> to vector<6x8xf32>
    %43 = vector.broadcast %41 : vector<1x8xf32> to vector<6x8xf32>
    %44 = arith.mulf %42, %43 : vector<6x8xf32>
    %45 = arith.addf %39, %44 : vector<6x8xf32>
    %c0_10 = arith.constant 0 : index
    %c7 = arith.constant 7 : index
    %46 = vector.load %arg1[%c0_10, %c7] : memref<8x128xf32, #tpu.memory_space<vmem>>, vector<6x1xf32>
    %47 = vector.extract_strided_slice %0 {offsets = [7, 0], sizes = [1, 8], strides = [1, 1]} : vector<8x8xf32> to vector<1x8xf32>
    %48 = vector.broadcast %46 : vector<6x1xf32> to vector<6x8xf32>
    %49 = vector.broadcast %47 : vector<1x8xf32> to vector<6x8xf32>
    %50 = arith.mulf %48, %49 : vector<6x8xf32>
    %51 = arith.addf %45, %50 : vector<6x8xf32>
    %cst = arith.constant 0.000000e+00 : f32
    %52 = vector.broadcast %cst : f32 to vector<6x8xf32>
    %53 = arith.subf %52, %51 : vector<6x8xf32>
    %54 = math.exp %53 : vector<6x8xf32>
    %cst_11 = arith.constant 1.000000e+00 : f32
    %55 = vector.broadcast %cst_11 : f32 to vector<6x8xf32>
    %56 = arith.addf %55, %54 : vector<6x8xf32>
    %cst_12 = arith.constant 1.000000e+00 : f32
    %57 = vector.broadcast %cst_12 : f32 to vector<6x8xf32>
    %58 = arith.divf %57, %56 : vector<6x8xf32>
    %c0_13 = arith.constant 0 : index
    %c19 = arith.constant 19 : index
    %59 = vector.load %arg1[%c0_13, %c19] : memref<8x128xf32, #tpu.memory_space<vmem>>, vector<4x1xf32>
    %60 = vector.shape_cast %59 : vector<4x1xf32> to vector<4x1xf32>
    %61 = vector.broadcast %60 : vector<4x1xf32> to vector<4x8xf32>
    %c0_14 = arith.constant 0 : index
    %c8 = arith.constant 8 : index
    %62 = vector.load %arg1[%c0_14, %c8] : memref<8x128xf32, #tpu.memory_space<vmem>>, vector<4x1xf32>
    %63 = vector.extract_strided_slice %58 {offsets = [0, 0], sizes = [1, 8], strides = [1, 1]} : vector<6x8xf32> to vector<1x8xf32>
    %64 = vector.broadcast %62 : vector<4x1xf32> to vector<4x8xf32>
    %65 = vector.broadcast %63 : vector<1x8xf32> to vector<4x8xf32>
    %66 = arith.mulf %64, %65 : vector<4x8xf32>
    %67 = arith.addf %61, %66 : vector<4x8xf32>
    %c0_15 = arith.constant 0 : index
    %c9 = arith.constant 9 : index
    %68 = vector.load %arg1[%c0_15, %c9] : memref<8x128xf32, #tpu.memory_space<vmem>>, vector<4x1xf32>
    %69 = vector.extract_strided_slice %58 {offsets = [1, 0], sizes = [1, 8], strides = [1, 1]} : vector<6x8xf32> to vector<1x8xf32>
    %70 = vector.broadcast %68 : vector<4x1xf32> to vector<4x8xf32>
    %71 = vector.broadcast %69 : vector<1x8xf32> to vector<4x8xf32>
    %72 = arith.mulf %70, %71 : vector<4x8xf32>
    %73 = arith.addf %67, %72 : vector<4x8xf32>
    %c0_16 = arith.constant 0 : index
    %c10 = arith.constant 10 : index
    %74 = vector.load %arg1[%c0_16, %c10] : memref<8x128xf32, #tpu.memory_space<vmem>>, vector<4x1xf32>
    %75 = vector.extract_strided_slice %58 {offsets = [2, 0], sizes = [1, 8], strides = [1, 1]} : vector<6x8xf32> to vector<1x8xf32>
    %76 = vector.broadcast %74 : vector<4x1xf32> to vector<4x8xf32>
    %77 = vector.broadcast %75 : vector<1x8xf32> to vector<4x8xf32>
    %78 = arith.mulf %76, %77 : vector<4x8xf32>
    %79 = arith.addf %73, %78 : vector<4x8xf32>
    %c0_17 = arith.constant 0 : index
    %c11 = arith.constant 11 : index
    %80 = vector.load %arg1[%c0_17, %c11] : memref<8x128xf32, #tpu.memory_space<vmem>>, vector<4x1xf32>
    %81 = vector.extract_strided_slice %58 {offsets = [3, 0], sizes = [1, 8], strides = [1, 1]} : vector<6x8xf32> to vector<1x8xf32>
    %82 = vector.broadcast %80 : vector<4x1xf32> to vector<4x8xf32>
    %83 = vector.broadcast %81 : vector<1x8xf32> to vector<4x8xf32>
    %84 = arith.mulf %82, %83 : vector<4x8xf32>
    %85 = arith.addf %79, %84 : vector<4x8xf32>
    %c0_18 = arith.constant 0 : index
    %c12 = arith.constant 12 : index
    %86 = vector.load %arg1[%c0_18, %c12] : memref<8x128xf32, #tpu.memory_space<vmem>>, vector<4x1xf32>
    %87 = vector.extract_strided_slice %58 {offsets = [4, 0], sizes = [1, 8], strides = [1, 1]} : vector<6x8xf32> to vector<1x8xf32>
    %88 = vector.broadcast %86 : vector<4x1xf32> to vector<4x8xf32>
    %89 = vector.broadcast %87 : vector<1x8xf32> to vector<4x8xf32>
    %90 = arith.mulf %88, %89 : vector<4x8xf32>
    %91 = arith.addf %85, %90 : vector<4x8xf32>
    %c0_19 = arith.constant 0 : index
    %c13 = arith.constant 13 : index
    %92 = vector.load %arg1[%c0_19, %c13] : memref<8x128xf32, #tpu.memory_space<vmem>>, vector<4x1xf32>
    %93 = vector.extract_strided_slice %58 {offsets = [5, 0], sizes = [1, 8], strides = [1, 1]} : vector<6x8xf32> to vector<1x8xf32>
    %94 = vector.broadcast %92 : vector<4x1xf32> to vector<4x8xf32>
    %95 = vector.broadcast %93 : vector<1x8xf32> to vector<4x8xf32>
    %96 = arith.mulf %94, %95 : vector<4x8xf32>
    %97 = arith.addf %91, %96 : vector<4x8xf32>
    %cst_20 = arith.constant 0.000000e+00 : f32
    %98 = vector.broadcast %cst_20 : f32 to vector<4x8xf32>
    %99 = arith.subf %98, %97 : vector<4x8xf32>
    %100 = math.exp %99 : vector<4x8xf32>
    %cst_21 = arith.constant 1.000000e+00 : f32
    %101 = vector.broadcast %cst_21 : f32 to vector<4x8xf32>
    %102 = arith.addf %101, %100 : vector<4x8xf32>
    %cst_22 = arith.constant 1.000000e+00 : f32
    %103 = vector.broadcast %cst_22 : f32 to vector<4x8xf32>
    %104 = arith.divf %103, %102 : vector<4x8xf32>
    %c0_23 = arith.constant 0 : index
    %c20 = arith.constant 20 : index
    %105 = vector.load %arg1[%c0_23, %c20] : memref<8x128xf32, #tpu.memory_space<vmem>>, vector<1x1xf32>
    %106 = vector.shape_cast %105 : vector<1x1xf32> to vector<1x1xf32>
    %107 = vector.broadcast %106 : vector<1x1xf32> to vector<1x8xf32>
    %c0_24 = arith.constant 0 : index
    %c14 = arith.constant 14 : index
    %108 = vector.load %arg1[%c0_24, %c14] : memref<8x128xf32, #tpu.memory_space<vmem>>, vector<1x1xf32>
    %109 = vector.extract_strided_slice %104 {offsets = [0, 0], sizes = [1, 8], strides = [1, 1]} : vector<4x8xf32> to vector<1x8xf32>
    %110 = vector.broadcast %108 : vector<1x1xf32> to vector<1x8xf32>
    %111 = arith.mulf %110, %109 : vector<1x8xf32>
    %112 = arith.addf %107, %111 : vector<1x8xf32>
    %c0_25 = arith.constant 0 : index
    %c15 = arith.constant 15 : index
    %113 = vector.load %arg1[%c0_25, %c15] : memref<8x128xf32, #tpu.memory_space<vmem>>, vector<1x1xf32>
    %114 = vector.extract_strided_slice %104 {offsets = [1, 0], sizes = [1, 8], strides = [1, 1]} : vector<4x8xf32> to vector<1x8xf32>
    %115 = vector.broadcast %113 : vector<1x1xf32> to vector<1x8xf32>
    %116 = arith.mulf %115, %114 : vector<1x8xf32>
    %117 = arith.addf %112, %116 : vector<1x8xf32>
    %c0_26 = arith.constant 0 : index
    %c16 = arith.constant 16 : index
    %118 = vector.load %arg1[%c0_26, %c16] : memref<8x128xf32, #tpu.memory_space<vmem>>, vector<1x1xf32>
    %119 = vector.extract_strided_slice %104 {offsets = [2, 0], sizes = [1, 8], strides = [1, 1]} : vector<4x8xf32> to vector<1x8xf32>
    %120 = vector.broadcast %118 : vector<1x1xf32> to vector<1x8xf32>
    %121 = arith.mulf %120, %119 : vector<1x8xf32>
    %122 = arith.addf %117, %121 : vector<1x8xf32>
    %c0_27 = arith.constant 0 : index
    %c17 = arith.constant 17 : index
    %123 = vector.load %arg1[%c0_27, %c17] : memref<8x128xf32, #tpu.memory_space<vmem>>, vector<1x1xf32>
    %124 = vector.extract_strided_slice %104 {offsets = [3, 0], sizes = [1, 8], strides = [1, 1]} : vector<4x8xf32> to vector<1x8xf32>
    %125 = vector.broadcast %123 : vector<1x1xf32> to vector<1x8xf32>
    %126 = arith.mulf %125, %124 : vector<1x8xf32>
    %127 = arith.addf %122, %126 : vector<1x8xf32>
    %cst_28 = arith.constant 0.000000e+00 : f32
    %128 = vector.broadcast %cst_28 : f32 to vector<1x8xf32>
    %129 = arith.subf %128, %127 : vector<1x8xf32>
    %130 = math.exp %129 : vector<1x8xf32>
    %cst_29 = arith.constant 1.000000e+00 : f32
    %131 = vector.broadcast %cst_29 : f32 to vector<1x8xf32>
    %132 = arith.addf %131, %130 : vector<1x8xf32>
    %cst_30 = arith.constant 1.000000e+00 : f32
    %133 = vector.broadcast %cst_30 : f32 to vector<1x8xf32>
    %134 = arith.divf %133, %132 : vector<1x8xf32>
    %c0_31 = arith.constant 0 : index
    %c0_32 = arith.constant 0 : index
    %135 = vector.load %arg2[%c0_31, %c0_32] : memref<1x8xf32, #tpu.memory_space<vmem>>, vector<1x8xf32>
    tpu.vector_store %arg2[%c0_31, %c0_32], %134 {strides = array<i32>} : memref<1x8xf32, #tpu.memory_space<vmem>>, vector<1x8xf32>,
    return
  }
}

</mosaic_0001>

<llo_original>
// kernel: tpu_custom_call.1
$region0: #{tpu_custom_call.1}
  #allocation0 [shape = 'u32[]', space=smem, size = 0x4, offset = 0x4, fixed_abs, tag = 'smem constant byte address 0x4 - core index']
  #allocation1 [shape = 'u32[144,128]{1,0:T(1,128)}', space=vmem, size = 0x12000, scoped, tag = 'internal scratch']
  %s0 = inlined_call_operand.hbm [shape: f32[8,8], index: 0, kind: input, shape index: {}]
  %s1 = inlined_call_operand.hbm [shape: f32[8,128], index: 1, kind: input, shape index: {}]
  %s2 = inlined_call_operand.hbm [shape: f32[1,8], index: 2, kind: output, shape index: {}]
  %s3 = sld [smem:[#allocation0]]
  $region26: #{tpu_custom_call.1} parent=0
    _
  %s5 = ssub.s32 1, %s3
  %s6 = scalar_select 0, %s5, %s3
  $region1: #{tpu_custom_call.1} parent=0
    #allocation2 [shape = 'u8[4096]{0}', space=vmem, size = 0x1000, scoped, tag = 'input window, operand 0, single buffered']
    #allocation3 [shape = 's32[1]{0}', space=sflag, size = 0x4, scoped, tag = 'scoped memory for tpu_custom_call.1']
    #allocation4 [shape = 's32[1]{0}', space=sflag, size = 0x4, scoped, tag = 'scoped memory for tpu_custom_call.1']
    #allocation5 [shape = 'u8[4096]{0}', space=vmem, size = 0x1000, scoped, tag = 'input window, operand 1, single buffered']
    #allocation6 [shape = 's32[1]{0}', space=sflag, size = 0x4, scoped, tag = 'scoped memory for tpu_custom_call.1']
    #allocation7 [shape = 'u8[512]{0}', space=vmem, size = 0x400, scoped, tag = 'output window, operand 0, single buffered']
    %7 = vsyncpa [#allocation3], 0
    %8 = vsyncpa [#allocation6], 0
    %9 = vsyncpa [#allocation4], 0
    // Predicated region
    $region2: #{tpu_custom_call.1} parent=1 // pred_check
      _
    $region3: #{tpu_custom_call.1} parent=1 // pred_check_branch
      %11 = sbr.rel (0) target = $region5
    $region4: #{tpu_custom_call.1} parent=1 // pred_region
      %s13 = ssub.s32 128, 128
      %14 = vsyncadd [#allocation3], %s13
      %s16 = sshll.u32 [#allocation2], 4
      %s17 = int_to_ptr.vmem [resolvable:$true] %s16
      %19 = dma.hbm_to_vmem [thread:$0]  %s0, 128, %s17, [#allocation3]
    $region5: #{tpu_custom_call.1} parent=1 // pred_fallthru
      _
    // Predicated region
    $region6: #{tpu_custom_call.1} parent=1 // pred_check
      _
    $region7: #{tpu_custom_call.1} parent=1 // pred_check_branch
      %21 = sbr.rel (0) target = $region9
    $region8: #{tpu_custom_call.1} parent=1 // pred_region
      %s23 = ssub.s32 128, 128
      %24 = vsyncadd [#allocation6], %s23
      %s26 = sshll.u32 [#allocation5], 4
      %s27 = int_to_ptr.vmem [resolvable:$true] %s26
      %29 = dma.hbm_to_vmem [thread:$0]  %s1, 128, %s27, [#allocation6]
    $region9: #{tpu_custom_call.1} parent=1 // pred_fallthru
      _
    // Predicated region
    $region10: #{tpu_custom_call.1} parent=1 // pred_check
      _
    $region11: #{tpu_custom_call.1} parent=1 // pred_check_branch
      %31 = sbr.rel (0) target = $region13
    $region12: #{tpu_custom_call.1} parent=1 // pred_region
      %32 = dma.done [#allocation3], 128
    $region13: #{tpu_custom_call.1} parent=1 // pred_fallthru
      _
    // Predicated region
    $region14: #{tpu_custom_call.1} parent=1 // pred_check
      _
    $region15: #{tpu_custom_call.1} parent=1 // pred_check_branch
      %34 = sbr.rel (0) target = $region17
    $region16: #{tpu_custom_call.1} parent=1 // pred_region
      %35 = dma.done [#allocation6], 128
    $region17: #{tpu_custom_call.1} parent=1 // pred_fallthru
      _
    %v36 = vld [vmem:[#allocation2] sm:$0xff]
    %v37 = vld [vmem:[#allocation5] sm:$0x3f]
    %39 = vset.pattern.permute.xlu0 18
    %40 = vperm.xlu0 %39, %v37
    %v41 = vpop.permute.xlu0 %40
    %43 = vset.pattern.permute.xlu0 0
    %44 = vperm.xlu0 %43, %v37
    %v45 = vpop.permute.xlu0 %44
    %v47 = vlaneseq
    %v48 = vshrl.u32 %v47, 7
    %v49 = vsub.s32 0, %v48
    %v50 = vrot.slane %v36, %v49
    %v51 = vmul.f32 %v45, %v50
    %v52 = vadd.f32 %v41, %v51
    %53 = vset.pattern.permute.xlu0 1
    %54 = vperm.xlu0 %53, %v37
    %v55 = vpop.permute.xlu0 %54
    %v57 = vlaneseq
    %v58 = vshrl.u32 %v57, 7
    %v59 = vsub.s32 1, %v58
    %v60 = vrot.slane %v36, %v59
    %v61 = vmul.f32 %v55, %v60
    %v62 = vadd.f32 %v52, %v61
    %63 = vset.pattern.permute.xlu0 2
    %64 = vperm.xlu0 %63, %v37
    %v65 = vpop.permute.xlu0 %64
    %v67 = vlaneseq
    %v68 = vshrl.u32 %v67, 7
    %v69 = vsub.s32 2, %v68
    %v70 = vrot.slane %v36, %v69
    %v71 = vmul.f32 %v65, %v70
    %v72 = vadd.f32 %v62, %v71
    %73 = vset.pattern.permute.xlu0 3
    %74 = vperm.xlu0 %73, %v37
    %v75 = vpop.permute.xlu0 %74
    %v77 = vlaneseq
    %v78 = vshrl.u32 %v77, 7
    %v79 = vsub.s32 3, %v78
    %v80 = vrot.slane %v36, %v79
    %v81 = vmul.f32 %v75, %v80
    %v82 = vadd.f32 %v72, %v81
    %83 = vset.pattern.permute.xlu0 4
    %84 = vperm.xlu0 %83, %v37
    %v85 = vpop.permute.xlu0 %84
    %v87 = vlaneseq
    %v88 = vshrl.u32 %v87, 7
    %v89 = vsub.s32 4, %v88
    %v90 = vrot.slane %v36, %v89
    %v91 = vmul.f32 %v85, %v90
    %v92 = vadd.f32 %v82, %v91
    %93 = vset.pattern.permute.xlu0 5
    %94 = vperm.xlu0 %93, %v37
    %v95 = vpop.permute.xlu0 %94
    %v97 = vlaneseq
    %v98 = vshrl.u32 %v97, 7
    %v99 = vsub.s32 5, %v98
    %v100 = vrot.slane %v36, %v99
    %v101 = vmul.f32 %v95, %v100
    %v102 = vadd.f32 %v92, %v101
    %103 = vset.pattern.permute.xlu0 6
    %104 = vperm.xlu0 %103, %v37
    %v105 = vpop.permute.xlu0 %104
    %v107 = vlaneseq
    %v108 = vshrl.u32 %v107, 7
    %v109 = vsub.s32 6, %v108
    %v110 = vrot.slane %v36, %v109
    %v111 = vmul.f32 %v105, %v110
    %v112 = vadd.f32 %v102, %v111
    %113 = vset.pattern.permute.xlu0 7
    %114 = vperm.xlu0 %113, %v37
    %v115 = vpop.permute.xlu0 %114
    %v117 = vlaneseq
    %v118 = vshrl.u32 %v117, 7
    %v119 = vsub.s32 7, %v118
    %v120 = vrot.slane %v36, %v119
    %v121 = vmul.f32 %v115, %v120
    %v122 = vadd.f32 %v112, %v121
    %v123 = vsub.f32 0.0, %v122
    %v124 = vmul.f32 %v123, 1.442695
    %v125 = vpow.pop %v124
    %v126 = vadd.f32 %v125, 1.0
    %v127 = vrcp.pop %v126
    %v128 = vmul.f32 1.0, %v127
    %v129 = vld [vmem:[#allocation5] sm:$0xf]
    %131 = vset.pattern.permute.xlu0 19
    %132 = vperm.xlu0 %131, %v129
    %v133 = vpop.permute.xlu0 %132
    %135 = vset.pattern.permute.xlu0 8
    %136 = vperm.xlu0 %135, %v129
    %v137 = vpop.permute.xlu0 %136
    %v139 = vlaneseq
    %v140 = vshrl.u32 %v139, 7
    %v141 = vsub.s32 0, %v140
    %v142 = vrot.slane %v128, %v141
    %v143 = vmul.f32 %v137, %v142
    %v144 = vadd.f32 %v133, %v143
    %145 = vset.pattern.permute.xlu0 9
    %146 = vperm.xlu0 %145, %v129
    %v147 = vpop.permute.xlu0 %146
    %v149 = vlaneseq
    %v150 = vshrl.u32 %v149, 7
    %v151 = vsub.s32 1, %v150
    %v152 = vrot.slane %v128, %v151
    %v153 = vmul.f32 %v147, %v152
    %v154 = vadd.f32 %v144, %v153
    %155 = vset.pattern.permute.xlu0 10
    %156 = vperm.xlu0 %155, %v129
    %v157 = vpop.permute.xlu0 %156
    %v159 = vlaneseq
    %v160 = vshrl.u32 %v159, 7
    %v161 = vsub.s32 2, %v160
    %v162 = vrot.slane %v128, %v161
    %v163 = vmul.f32 %v157, %v162
    %v164 = vadd.f32 %v154, %v163
    %165 = vset.pattern.permute.xlu0 11
    %166 = vperm.xlu0 %165, %v129
    %v167 = vpop.permute.xlu0 %166
    %v169 = vlaneseq
    %v170 = vshrl.u32 %v169, 7
    %v171 = vsub.s32 3, %v170
    %v172 = vrot.slane %v128, %v171
    %v173 = vmul.f32 %v167, %v172
    %v174 = vadd.f32 %v164, %v173
    %175 = vset.pattern.permute.xlu0 12
    %176 = vperm.xlu0 %175, %v129
    %v177 = vpop.permute.xlu0 %176
    %v179 = vlaneseq
    %v180 = vshrl.u32 %v179, 7
    %v181 = vsub.s32 4, %v180
    %v182 = vrot.slane %v128, %v181
    %v183 = vmul.f32 %v177, %v182
    %v184 = vadd.f32 %v174, %v183
    %185 = vset.pattern.permute.xlu0 13
    %186 = vperm.xlu0 %185, %v129
    %v187 = vpop.permute.xlu0 %186
    %v189 = vlaneseq
    %v190 = vshrl.u32 %v189, 7
    %v191 = vsub.s32 5, %v190
    %v192 = vrot.slane %v128, %v191
    %v193 = vmul.f32 %v187, %v192
    %v194 = vadd.f32 %v184, %v193
    %v195 = vsub.f32 0.0, %v194
    %v196 = vmul.f32 %v195, 1.442695
    %v197 = vpow.pop %v196
    %v198 = vadd.f32 %v197, 1.0
    %v199 = vrcp.pop %v198
    %v200 = vmul.f32 1.0, %v199
    %v201 = vld [vmem:[#allocation5] sm:$0x1]
    %203 = vset.pattern.permute.xlu0 20
    %204 = vperm.xlu0 %203, %v201
    %v205 = vpop.permute.xlu0 %204
    %207 = vset.pattern.permute.xlu0 14
    %208 = vperm.xlu0 %207, %v201
    %v209 = vpop.permute.xlu0 %208
    %v211 = vmul.f32 %v209, %v200
    %v212 = vadd.f32 %v205, %v211
    %213 = vset.pattern.permute.xlu0 15
    %214 = vperm.xlu0 %213, %v201
    %v215 = vpop.permute.xlu0 %214
    %v218 = vrot.slane %v200, 1
    %v220 = vmul.f32 %v215, %v218
    %v221 = vadd.f32 %v212, %v220
    %222 = vset.pattern.permute.xlu0 16
    %223 = vperm.xlu0 %222, %v201
    %v224 = vpop.permute.xlu0 %223
    %v226 = vrot.slane %v200, 2
    %v228 = vmul.f32 %v224, %v226
    %v229 = vadd.f32 %v221, %v228
    %230 = vset.pattern.permute.xlu0 17
    %231 = vperm.xlu0 %230, %v201
    %v232 = vpop.permute.xlu0 %231
    %v234 = vrot.slane %v200, 3
    %v236 = vmul.f32 %v232, %v234
    %v237 = vadd.f32 %v229, %v236
    %v238 = vsub.f32 0.0, %v237
    %v239 = vmul.f32 %v238, 1.442695
    %v240 = vpow.pop %v239
    %v241 = vadd.f32 %v240, 1.0
    %v242 = vrcp.pop %v241
    %v243 = vmul.f32 1.0, %v242
    %vm244 = vcmask 57344
    %245 = vst.msk [vmem:[#allocation7] sm:$0x1] %vm244, %v243
    // Predicated region
    $region18: #{tpu_custom_call.1} parent=1 // pred_check
      _
    $region19: #{tpu_custom_call.1} parent=1 // pred_check_branch
      %247 = sbr.rel (0) target = $region21
    $region20: #{tpu_custom_call.1} parent=1 // pred_region
      %s249 = ssub.s32 16, 16
      %250 = vsyncadd [#allocation4], %s249
      %s252 = sshll.u32 [#allocation7], 4
      %s253 = int_to_ptr.vmem [resolvable:$true] %s252
      %255 = dma.vmem_to_hbm [thread:$0]  %s253, 16, %s2, [#allocation4]
    $region21: #{tpu_custom_call.1} parent=1 // pred_fallthru
      _
    // Predicated region
    $region22: #{tpu_custom_call.1} parent=1 // pred_check
      _
    $region23: #{tpu_custom_call.1} parent=1 // pred_check_branch
      %257 = sbr.rel (0) target = $region25
    $region24: #{tpu_custom_call.1} parent=1 // pred_region
      %258 = dma.done [#allocation4], 16
    $region25: #{tpu_custom_call.1} parent=1 // pred_fallthru
      _
    %259 = vsyncpa [#allocation3], 1
    %260 = vsyncpa [#allocation6], 1
    %261 = vsyncpa [#allocation4], 1

</llo_original>
